<compile_context>
chip_gen: v6e
topology: v6e:2x2x1
jax: 0.10.0
libtpu: 0.0.40
codegen_flags: <defaults>
</compile_context>

<pallas_src>
import jax
import jax.numpy as jnp
from jax.experimental import pallas as pl
from jax.experimental.pallas import tpu as pltpu


# ----------------------------------------------------------------------------
# Kernel
# ----------------------------------------------------------------------------
def _attention_body(h_ref, p_ref, f_ref, m_ref, wh_ref, bh_ref, wa_ref, o_ref):
    """Fused tanh-attention for one batch tile.

    h_ref  : (TB, R)        hidden state rows (any float dtype)
    p_ref  : (TB, K, A)     pre-projected att feats (f32 or bf16)
    f_ref  : (TB, K, D)     att feats (f32 or bf16)
    m_ref  : (TB, K)        optional mask
    wh_ref : (R, A)  f32    h2att weight, stored (in, out)
    bh_ref : (1, A)  f32    h2att bias
    wa_ref : (1, A)  f32    alpha_net weight as a row
    o_ref  : (TB, D) f32
    """
    f32 = jnp.float32

    # h2att: (TB, R) @ (R, A) on the MXU (M = TB rows per grid step).
    att_h = jnp.dot(h_ref[...].astype(f32), wh_ref[...],
                    preferred_element_type=f32) + bh_ref[...]          # (TB, A)

    # dot = tanh(p_att + att_h): EUP tanh over (TB, K, A), f32 math.
    dot = jnp.tanh(p_ref[...].astype(f32) + att_h[:, None, :])         # (TB, K, A)

    # alpha_net as a VPU multiply + lane reduction -> 2-D (TB, K) logits.
    # (b_alpha dropped: softmax shift invariance makes it a no-op.)
    logits = jnp.sum(dot * wa_ref[...], axis=-1)                       # (TB, K)

    # (masked) softmax over K (lane axis); mask folded in before the single
    # normalization (== softmax -> mask-mul -> renorm); exact division.
    lmax = jnp.max(logits, axis=-1, keepdims=True)
    e = jnp.exp(logits - lmax)                                         # (TB, K)
    if m_ref is not None:
        e = e * m_ref[...].astype(f32)
    w = e / jnp.sum(e, axis=-1, keepdims=True)                         # (TB, K)

    # att_res = sum_k w[b,k] * feats[b,k,:]  -- VPU MAC + sublane reduction,
    # accumulated in f32 (w stays f32); no q=1 MXU matmul.
    res = jnp.sum(w[:, :, None] * f_ref[...].astype(f32), axis=1)      # (TB, D)
    o_ref[...] = res.astype(o_ref.dtype)


def _kernel_with_mask(h_ref, p_ref, f_ref, m_ref, wh_ref, bh_ref, wa_ref, o_ref):
    _attention_body(h_ref, p_ref, f_ref, m_ref, wh_ref, bh_ref, wa_ref, o_ref)


def _kernel_no_mask(h_ref, p_ref, f_ref, wh_ref, bh_ref, wa_ref, o_ref):
    _attention_body(h_ref, p_ref, f_ref, None, wh_ref, bh_ref, wa_ref, o_ref)


# ----------------------------------------------------------------------------
# VMEM sizing helpers
# ----------------------------------------------------------------------------
def _vmem_capacity_bytes():
    try:
        return int(pltpu.get_tpu_info().vmem_capacity_bytes)
    except Exception:
        return 64 * 1024 * 1024        # conservative fallback (v7x per-TC VMEM)


def _estimate_vmem(tb, K, A, D, R, stream_itemsize, has_mask):
    """Rough per-kernel VMEM usage: double-buffered streamed blocks + resident
    weights + f32 in-kernel intermediates."""
    f32 = 4
    db = 2  # BlockSpec double buffering
    blocks = db * tb * K * (A + D) * stream_itemsize      # p_att + feats blocks
    blocks += db * tb * R * f32                           # h block
    blocks += db * tb * D * f32                           # output block
    if has_mask:
        blocks += db * tb * K * f32
    weights = db * (R * A + 2 * A) * f32                  # wh, bh, wa

    inter = 2 * tb * K * A * f32                          # tanh out + wa product
    inter += tb * K * D * f32                             # w * feats product
    if stream_itemsize < 4:
        inter += tb * K * (A + D) * f32                   # in-kernel f32 upcasts
    inter += tb * (A + D + 4 * K) * f32                   # att_h, res, logits/e/w
    return blocks + weights + inter


def _pick_batch_tile(B, K, A, D, R, stream_itemsize, has_mask, budget):
    """Largest batch tile (multiple of 8 sublanes) whose full VMEM estimate
    (streamed blocks + intermediates) stays within budget; kept to >= 2 grid
    steps when the batch allows (2 TensorCores on v7x / megacore sharding)."""
    b_pad8 = ((B + 7) // 8) * 8
    tb = 8
    cand = 16
    while cand <= min(1024, b_pad8):
        if _estimate_vmem(cand, K, A, D, R, stream_itemsize, has_mask) <= budget:
            tb = cand
            cand += 8
        else:
            break
    if b_pad8 >= 16:
        half = (((B + 1) // 2) + 7) // 8 * 8
        tb = min(tb, max(8, half))
    return int(tb)


# ----------------------------------------------------------------------------
# Wrapper
# ----------------------------------------------------------------------------
def attention_forward(h, att_feats, p_att_feats, wh_t, bh, wa, ba=None,
                      att_masks=None):
    """Fused Pallas-TPU forward of the Attention module.

    h           : (B, rnn_size)
    att_feats   : (B, ..., feat_dim)   (flattened to (B, att_size, feat_dim))
    p_att_feats : (B, ..., att_hid)
    wh_t, bh    : h2att weight (rnn_size, att_hid) and bias (att_hid,)
    wa, ba      : alpha_net weight ((att_hid,1)/(1,att_hid)/(att_hid,)) and bias.
                  ba is a no-op under softmax and is dropped (exact).
    att_masks   : optional (B, att_size)

    The two big tensors are streamed in their given dtype: store them in bf16
    (once, outside the per-step path) to halve HBM traffic; all math is f32.
    """
    B, rnn_size = h.shape
    att_hid = wh_t.shape[1]
    feat_dim = att_feats.shape[-1]
    att_size = att_feats.size // B // feat_dim   # same rule as the torch module

    p_att = p_att_feats.reshape(B, att_size, att_hid)
    feats = att_feats.reshape(B, att_size, feat_dim)
    stream_itemsize = max(jnp.dtype(p_att.dtype).itemsize,
                          jnp.dtype(feats.dtype).itemsize)

    wh_f = wh_t.astype(jnp.float32)
    bh_f = bh.reshape(1, att_hid).astype(jnp.float32)
    wa_f = wa.reshape(1, att_hid).astype(jnp.float32)
    # alpha_net bias (ba) intentionally dropped: softmax shift invariance.

    has_mask = att_masks is not None

    cap = _vmem_capacity_bytes()
    budget = int(cap * 0.55)
    TB = _pick_batch_tile(B, att_size, att_hid, feat_dim, rnn_size,
                          stream_itemsize, has_mask, budget)
    grid = (pl.cdiv(B, TB),)   # ragged last block: OOB rows are masked on store

    in_specs = [
        pl.BlockSpec((TB, rnn_size), lambda b: (b, 0)),
        pl.BlockSpec((TB, att_size, att_hid), lambda b: (b, 0, 0)),
        pl.BlockSpec((TB, att_size, feat_dim), lambda b: (b, 0, 0)),
    ]
    args = [h, p_att, feats]
    if has_mask:
        mask = att_masks.reshape(B, att_size).astype(jnp.float32)
        in_specs.append(pl.BlockSpec((TB, att_size), lambda b: (b, 0)))
        args.append(mask)
    in_specs += [
        pl.BlockSpec((rnn_size, att_hid), lambda b: (0, 0)),
        pl.BlockSpec((1, att_hid), lambda b: (0, 0)),
        pl.BlockSpec((1, att_hid), lambda b: (0, 0)),
    ]
    args += [wh_f, bh_f, wa_f]

    need = _estimate_vmem(TB, att_size, att_hid, feat_dim, rnn_size,
                          stream_itemsize, has_mask)
    vmem_limit = int(min(max(need + (8 << 20), 32 << 20),
                         max(cap - (2 << 20), 32 << 20)))

    kernel = _kernel_with_mask if has_mask else _kernel_no_mask

    out = pl.pallas_call(
        kernel,
        out_shape=jax.ShapeDtypeStruct((B, feat_dim), jnp.float32),
        grid_spec=pltpu.PrefetchScalarGridSpec(
            num_scalar_prefetch=0,
            grid=grid,
            in_specs=in_specs,
            out_specs=pl.BlockSpec((TB, feat_dim), lambda b: (b, 0)),
        ),
        compiler_params=pltpu.CompilerParams(
            dimension_semantics=("parallel",),
            vmem_limit_bytes=vmem_limit),
    )(*args)
    return out


# ----------------------------------------------------------------------------
# Pure-JAX reference (mirrors the PyTorch module exactly, including ba)
# ----------------------------------------------------------------------------
def attention_reference(h, att_feats, p_att_feats, wh_t, bh, wa, ba,
                        att_masks=None):
    B = h.shape[0]
    att_hid = wh_t.shape[1]
    feat_dim = att_feats.shape[-1]
    att_size = att_feats.size // B // feat_dim
    att = p_att_feats.reshape(B, att_size, att_hid)
    att_h = h @ wh_t + bh
    dot = jnp.tanh(att + att_h[:, None, :])
    logits = (dot.reshape(-1, att_hid) @ wa.reshape(att_hid, 1)
              + ba).reshape(B, att_size)
    weight = jax.nn.softmax(logits, axis=1)
    if att_masks is not None:
        weight = weight * att_masks.reshape(B, att_size)
        weight = weight / weight.sum(1, keepdims=True)
    feats = att_feats.reshape(B, att_size, feat_dim)
    return jnp.einsum("bk,bkd->bd", weight, feats)


if __name__ == "__main__":
    key = jax.random.PRNGKey(0)
    B, rnn_size, att_hid, att_size, feat_dim = 3, 64, 64, 20, 128

    k = jax.random.split(key, 8)
    h = jax.random.normal(k[0], (B, rnn_size), jnp.float32)
    att_feats = jax.random.normal(k[1], (B, att_size, feat_dim), jnp.float32)
    p_att_feats = jax.random.normal(k[2], (B, att_size, att_hid), jnp.float32)
    att_masks = (jax.random.uniform(k[3], (B, att_size)) > 0.3).astype(jnp.float32)
    att_masks = att_masks.at[:, 0].set(1.0)   # every row has a valid position

    # deterministic "Linear" parameters (stored pre-transposed: (in, out))
    wh_t = jax.random.normal(k[4], (rnn_size, att_hid), jnp.float32) * 0.1
    bh = jax.random.normal(k[5], (att_hid,), jnp.float32) * 0.1
    wa = jax.random.normal(k[6], (att_hid, 1), jnp.float32) * 0.1
    ba = jax.random.normal(k[7], (1,), jnp.float32) * 0.1

    out_masked = attention_forward(h, att_feats, p_att_feats, wh_t, bh, wa, ba,
                                   att_masks=att_masks)
    out_nomask = attention_forward(h, att_feats, p_att_feats, wh_t, bh, wa, ba,
                                   att_masks=None)
    jax.block_until_ready((out_masked, out_nomask))

    ref_masked = attention_reference(h, att_feats, p_att_feats, wh_t, bh, wa, ba,
                                     att_masks=att_masks)
    ref_nomask = attention_reference(h, att_feats, p_att_feats, wh_t, bh, wa, ba,
                                     att_masks=None)

    assert out_masked.shape == (B, feat_dim)
    assert out_nomask.shape == (B, feat_dim)
    assert jnp.allclose(out_masked, ref_masked, atol=1e-3, rtol=1e-3), \
        "masked output mismatch vs reference"
    assert jnp.allclose(out_nomask, ref_nomask, atol=1e-3, rtol=1e-3), \
        "unmasked output mismatch vs reference"
    print("KERNEL_OK")
</pallas_src>

<mosaic_0001>
module attributes {stable_mosaic.version = 11 : i64} {
  func.func @_kernel_with_mask(%arg0: i32, %arg1: memref<8x64xf32, #tpu.memory_space<vmem>>, %arg2: memref<8x20x64xf32, #tpu.memory_space<vmem>>, %arg3: memref<8x20x128xf32, #tpu.memory_space<vmem>>, %arg4: memref<8x20xf32, #tpu.memory_space<vmem>>, %arg5: memref<64x64xf32, #tpu.memory_space<vmem>>, %arg6: memref<1x64xf32, #tpu.memory_space<vmem>>, %arg7: memref<1x64xf32, #tpu.memory_space<vmem>>, %arg8: memref<8x128xf32, #tpu.memory_space<vmem>>) attributes {dimension_semantics = [#tpu.dimension_semantics<parallel>], iteration_bounds = array<i64: 1>, scalar_prefetch = 0 : i64, scratch_operands = 0 : i64, tpu.core_type = #tpu.core_type<tc>, window_params = [{transform_indices = @transform_0, window_bounds = array<i64: 8, 64>}, {transform_indices = @transform_1, window_bounds = array<i64: 8, 20, 64>}, {transform_indices = @transform_2, window_bounds = array<i64: 8, 20, 128>}, {transform_indices = @transform_3, window_bounds = array<i64: 8, 20>}, {pipeline_mode = #tpu.pipeline_mode<synchronous>, transform_indices = @transform_4, window_bounds = array<i64: 64, 64>}, {pipeline_mode = #tpu.pipeline_mode<synchronous>, transform_indices = @transform_5, window_bounds = array<i64: 1, 64>}, {pipeline_mode = #tpu.pipeline_mode<synchronous>, transform_indices = @transform_6, window_bounds = array<i64: 1, 64>}, {transform_indices = @transform_7, window_bounds = array<i64: 8, 128>}]} {
    %c0 = arith.constant 0 : index
    %c0_0 = arith.constant 0 : index
    %0 = vector.load %arg1[%c0, %c0_0] : memref<8x64xf32, #tpu.memory_space<vmem>>, vector<8x64xf32>
    %c0_1 = arith.constant 0 : index
    %c0_2 = arith.constant 0 : index
    %1 = vector.load %arg5[%c0_1, %c0_2] : memref<64x64xf32, #tpu.memory_space<vmem>>, vector<64x64xf32>
    %cst = arith.constant dense<0.000000e+00> : vector<8x64xf32>
    %2 = tpu.matmul %0, %1, %cst {dimension_numbers = #tpu.dot_dimension_numbers<[1], [0], [0], [1], [0, 0, 1, 1], [], []>} : vector<8x64xf32>, vector<64x64xf32>, vector<8x64xf32> -> vector<8x64xf32>
    %c0_3 = arith.constant 0 : index
    %c0_4 = arith.constant 0 : index
    %3 = vector.load %arg6[%c0_3, %c0_4] : memref<1x64xf32, #tpu.memory_space<vmem>>, vector<1x64xf32>
    %4 = vector.broadcast %3 : vector<1x64xf32> to vector<8x64xf32>
    %5 = arith.addf %2, %4 : vector<8x64xf32>
    %c0_5 = arith.constant 0 : index
    %c0_6 = arith.constant 0 : index
    %c0_7 = arith.constant 0 : index
    %6 = vector.load %arg2[%c0_5, %c0_6, %c0_7] : memref<8x20x64xf32, #tpu.memory_space<vmem>>, vector<8x20x64xf32>
    %7 = vector.shape_cast %5 : vector<8x64xf32> to vector<8x1x64xf32>
    %8 = vector.broadcast %7 : vector<8x1x64xf32> to vector<8x20x64xf32>
    %9 = arith.addf %6, %8 : vector<8x20x64xf32>
    %10 = math.tanh %9 : vector<8x20x64xf32>
    %c0_8 = arith.constant 0 : index
    %c0_9 = arith.constant 0 : index
    %11 = vector.load %arg7[%c0_8, %c0_9] : memref<1x64xf32, #tpu.memory_space<vmem>>, vector<1x64xf32>
    %12 = vector.shape_cast %11 : vector<1x64xf32> to vector<1x1x64xf32>
    %13 = vector.broadcast %12 : vector<1x1x64xf32> to vector<8x20x64xf32>
    %14 = arith.mulf %10, %13 : vector<8x20x64xf32>
    %cst_10 = arith.constant dense<0.000000e+00> : vector<8x20xf32>
    %15 = vector.multi_reduction <add>, %14, %cst_10 [2] : vector<8x20x64xf32> to vector<8x20xf32>
    %cst_11 = arith.constant dense<0xFF800000> : vector<8xf32>
    %16 = vector.multi_reduction <maximumf>, %15, %cst_11 [1] : vector<8x20xf32> to vector<8xf32>
    %17 = vector.shape_cast %16 : vector<8xf32> to vector<8x1xf32>
    %18 = vector.broadcast %17 : vector<8x1xf32> to vector<8x20xf32>
    %19 = arith.subf %15, %18 : vector<8x20xf32>
    %20 = math.exp %19 : vector<8x20xf32>
    %c0_12 = arith.constant 0 : index
    %c0_13 = arith.constant 0 : index
    %21 = vector.load %arg4[%c0_12, %c0_13] : memref<8x20xf32, #tpu.memory_space<vmem>>, vector<8x20xf32>
    %22 = arith.mulf %20, %21 : vector<8x20xf32>
    %cst_14 = arith.constant dense<0.000000e+00> : vector<8xf32>
    %23 = vector.multi_reduction <add>, %22, %cst_14 [1] : vector<8x20xf32> to vector<8xf32>
    %24 = vector.shape_cast %23 : vector<8xf32> to vector<8x1xf32>
    %25 = vector.broadcast %24 : vector<8x1xf32> to vector<8x20xf32>
    %26 = arith.divf %22, %25 : vector<8x20xf32>
    %27 = vector.shape_cast %26 : vector<8x20xf32> to vector<8x20x1xf32>
    %c0_15 = arith.constant 0 : index
    %c0_16 = arith.constant 0 : index
    %c0_17 = arith.constant 0 : index
    %28 = vector.load %arg3[%c0_15, %c0_16, %c0_17] : memref<8x20x128xf32, #tpu.memory_space<vmem>>, vector<8x20x128xf32>
    %29 = vector.broadcast %27 : vector<8x20x1xf32> to vector<8x20x128xf32>
    %30 = arith.mulf %29, %28 : vector<8x20x128xf32>
    %cst_18 = arith.constant dense<0.000000e+00> : vector<8x128xf32>
    %31 = vector.multi_reduction <add>, %30, %cst_18 [1] : vector<8x20x128xf32> to vector<8x128xf32>
    %c0_19 = arith.constant 0 : index
    %c0_20 = arith.constant 0 : index
    %32 = vector.load %arg8[%c0_19, %c0_20] : memref<8x128xf32, #tpu.memory_space<vmem>>, vector<8x128xf32>
    tpu.vector_store %arg8[%c0_19, %c0_20], %31 {strides = array<i32>} : memref<8x128xf32, #tpu.memory_space<vmem>>, vector<8x128xf32>,
    return
  }
  func.func @transform_0(%arg0: i32) -> (i32, i32) {
    %c0_i32 = arith.constant 0 : i32
    %c0_i32_0 = arith.constant 0 : i32
    return %arg0, %c0_i32 : i32, i32
  }
  func.func @transform_1(%arg0: i32) -> (i32, i32, i32) {
    %c0_i32 = arith.constant 0 : i32
    %c0_i32_0 = arith.constant 0 : i32
    %c0_i32_1 = arith.constant 0 : i32
    return %arg0, %c0_i32, %c0_i32_0 : i32, i32, i32
  }
  func.func @transform_2(%arg0: i32) -> (i32, i32, i32) {
    %c0_i32 = arith.constant 0 : i32
    %c0_i32_0 = arith.constant 0 : i32
    %c0_i32_1 = arith.constant 0 : i32
    return %arg0, %c0_i32, %c0_i32_0 : i32, i32, i32
  }
  func.func @transform_3(%arg0: i32) -> (i32, i32) {
    %c0_i32 = arith.constant 0 : i32
    %c0_i32_0 = arith.constant 0 : i32
    return %arg0, %c0_i32 : i32, i32
  }
  func.func @transform_4(%arg0: i32) -> (i32, i32) {
    %c0_i32 = arith.constant 0 : i32
    %c0_i32_0 = arith.constant 0 : i32
    %c0_i32_1 = arith.constant 0 : i32
    return %c0_i32, %c0_i32_0 : i32, i32
  }
  func.func @transform_5(%arg0: i32) -> (i32, i32) {
    %c0_i32 = arith.constant 0 : i32
    %c0_i32_0 = arith.constant 0 : i32
    %c0_i32_1 = arith.constant 0 : i32
    return %c0_i32, %c0_i32_0 : i32, i32
  }
  func.func @transform_6(%arg0: i32) -> (i32, i32) {
    %c0_i32 = arith.constant 0 : i32
    %c0_i32_0 = arith.constant 0 : i32
    %c0_i32_1 = arith.constant 0 : i32
    return %c0_i32, %c0_i32_0 : i32, i32
  }
  func.func @transform_7(%arg0: i32) -> (i32, i32) {
    %c0_i32 = arith.constant 0 : i32
    %c0_i32_0 = arith.constant 0 : i32
    return %arg0, %c0_i32 : i32, i32
  }
}

</mosaic_0001>

<llo_original>
// kernel: tpu_custom_call.1
$region0: #{tpu_custom_call.1}
  #allocation0 [shape = 'u32[]', space=smem, size = 0x4, offset = 0x4, fixed_abs, tag = 'smem constant byte address 0x4 - core index']
  #allocation1 [shape = 'u32[144,128]{1,0:T(1,128)}', space=vmem, size = 0x12000, scoped, tag = 'internal scratch']
  %s0 = inlined_call_operand.hbm [shape: f32[3,64], index: 0, kind: input, shape index: {}]
  %s1 = inlined_call_operand.hbm [shape: f32[3,20,64], index: 1, kind: input, shape index: {}]
  %s2 = inlined_call_operand.hbm [shape: f32[3,20,128], index: 2, kind: input, shape index: {}]
  %s3 = inlined_call_operand.vmem [shape: f32[3,20], index: 3, kind: input, shape index: {}]
  %s4 = inlined_call_operand.hbm [shape: f32[64,64], index: 4, kind: input, shape index: {}]
  %s5 = inlined_call_operand.vmem [shape: f32[1,64], index: 5, kind: input, shape index: {}]
  %s6 = inlined_call_operand.vmem [shape: f32[1,64], index: 6, kind: input, shape index: {}]
  %s7 = inlined_call_operand.hbm [shape: f32[3,128], index: 7, kind: output, shape index: {}]
  %s8 = sld [smem:[#allocation0]]
  $region54: #{tpu_custom_call.1} parent=0
    _
  %s10 = ssub.s32 1, %s8
  %s11 = scalar_select 0, %s10, %s8
  $region1: #{tpu_custom_call.1} parent=0
    #allocation2 [shape = 'u8[4096]{0}', space=vmem, size = 0x1000, scoped, tag = 'input window, operand 0, single buffered']
    #allocation3 [shape = 's32[1]{0}', space=sflag, size = 0x4, scoped, tag = 'scoped memory for tpu_custom_call.1']
    #allocation4 [shape = 's32[1]{0}', space=sflag, size = 0x4, scoped, tag = 'scoped memory for tpu_custom_call.1']
    #allocation5 [shape = 'u8[98304]{0}', space=vmem, size = 0x18000, scoped, tag = 'input window, operand 1, single buffered']
    #allocation6 [shape = 's32[1]{0}', space=sflag, size = 0x4, scoped, tag = 'scoped memory for tpu_custom_call.1']
    #allocation7 [shape = 'u8[98304]{0}', space=vmem, size = 0x18000, scoped, tag = 'input window, operand 2, single buffered']
    #allocation8 [shape = 'u8[32768]{0}', space=vmem, size = 0x8000, scoped, tag = 'input window, operand 4, single buffered']
    #allocation9 [shape = 's32[1]{0}', space=sflag, size = 0x4, scoped, tag = 'scoped memory for tpu_custom_call.1']
    #allocation10 [shape = 'u8[4096]{0}', space=vmem, size = 0x1000, scoped, tag = 'output window, operand 0, single buffered']
    %12 = vsyncpa [#allocation3], 0
    %13 = vsyncpa [#allocation6], 0
    %14 = vsyncpa [#allocation9], 0
    %15 = vsyncpa [#allocation4], 0
    // Predicated region
    $region2: #{tpu_custom_call.1} parent=1 // pred_check
      _
    $region3: #{tpu_custom_call.1} parent=1 // pred_check_branch
      %17 = sbr.rel (0) target = $region5
    $region4: #{tpu_custom_call.1} parent=1 // pred_region
      %s19 = ssub.s32 128, 64
      %20 = vsyncadd [#allocation3], %s19
      %s21 = sshll.u32 [#allocation2], 4
      %s22 = int_to_ptr.vmem [resolvable:$true] %s21
      %27 = dma.hbm_to_vmem [thread:$0]  %s0, 64, %s22, [#allocation3], 64, 64, 4
    $region5: #{tpu_custom_call.1} parent=1 // pred_fallthru
      _
    // Predicated region
    $region6: #{tpu_custom_call.1} parent=1 // pred_check
      _
    $region7: #{tpu_custom_call.1} parent=1 // pred_check_branch
      %29 = sbr.rel (0) target = $region9
    $region8: #{tpu_custom_call.1} parent=1 // pred_region
      %s31 = ssub.s32 3072, 1152
      %32 = vsyncadd [#allocation6], %s31
      %s33 = sshll.u32 [#allocation5], 4
      %s34 = int_to_ptr.vmem [resolvable:$true] %s33
      %39 = dma.hbm_to_vmem [thread:$0]  %s1, 1152, %s34, [#allocation6], 128, 128, 8
    $region9: #{tpu_custom_call.1} parent=1 // pred_fallthru
      _
    // Predicated region
    $region10: #{tpu_custom_call.1} parent=1 // pred_check
      _
    $region11: #{tpu_custom_call.1} parent=1 // pred_check_branch
      %41 = sbr.rel (0) target = $region13
    $region12: #{tpu_custom_call.1} parent=1 // pred_region
      %s43 = ssub.s32 3072, 1152
      %44 = vsyncadd [#allocation6], %s43
      %s45 = sshll.u32 [#allocation7], 4
      %s46 = int_to_ptr.vmem [resolvable:$true] %s45
      %51 = dma.hbm_to_vmem [thread:$0]  %s2, 1152, %s46, [#allocation6], 128, 128, 8
    $region13: #{tpu_custom_call.1} parent=1 // pred_fallthru
      _
    // Predicated region
    $region14: #{tpu_custom_call.1} parent=1 // pred_check
      _
    $region15: #{tpu_custom_call.1} parent=1 // pred_check_branch
      %53 = sbr.rel (0) target = $region17
    $region16: #{tpu_custom_call.1} parent=1 // pred_region
      _
    $region17: #{tpu_custom_call.1} parent=1 // pred_fallthru
      _
    // Predicated region
    $region18: #{tpu_custom_call.1} parent=1 // pred_check
      _
    $region19: #{tpu_custom_call.1} parent=1 // pred_check_branch
      %55 = sbr.rel (0) target = $region21
    $region20: #{tpu_custom_call.1} parent=1 // pred_region
      %s57 = ssub.s32 1024, 1024
      %58 = vsyncadd [#allocation9], %s57
      %s59 = sshll.u32 [#allocation8], 4
      %s60 = int_to_ptr.vmem [resolvable:$true] %s59
      %65 = dma.hbm_to_vmem [thread:$0]  %s4, 1024, %s60, [#allocation9], 128, 128, 8
    $region21: #{tpu_custom_call.1} parent=1 // pred_fallthru
      _
    // Predicated region
    $region22: #{tpu_custom_call.1} parent=1 // pred_check
      _
    $region23: #{tpu_custom_call.1} parent=1 // pred_check_branch
      %67 = sbr.rel (0) target = $region25
    $region24: #{tpu_custom_call.1} parent=1 // pred_region
      _
    $region25: #{tpu_custom_call.1} parent=1 // pred_fallthru
      _
    // Predicated region
    $region26: #{tpu_custom_call.1} parent=1 // pred_check
      _
    $region27: #{tpu_custom_call.1} parent=1 // pred_check_branch
      %69 = sbr.rel (0) target = $region29
    $region28: #{tpu_custom_call.1} parent=1 // pred_region
      _
    $region29: #{tpu_custom_call.1} parent=1 // pred_fallthru
      _
    // Predicated region
    $region30: #{tpu_custom_call.1} parent=1 // pred_check
      _
    $region31: #{tpu_custom_call.1} parent=1 // pred_check_branch
      %71 = sbr.rel (0) target = $region33
    $region32: #{tpu_custom_call.1} parent=1 // pred_region
      %72 = dma.done [#allocation3], 128
    $region33: #{tpu_custom_call.1} parent=1 // pred_fallthru
      _
    // Predicated region
    $region34: #{tpu_custom_call.1} parent=1 // pred_check
      _
    $region35: #{tpu_custom_call.1} parent=1 // pred_check_branch
      %74 = sbr.rel (0) target = $region37
    $region36: #{tpu_custom_call.1} parent=1 // pred_region
      %75 = dma.done [#allocation6], 3072
    $region37: #{tpu_custom_call.1} parent=1 // pred_fallthru
      _
    // Predicated region
    $region38: #{tpu_custom_call.1} parent=1 // pred_check
      _
    $region39: #{tpu_custom_call.1} parent=1 // pred_check_branch
      %77 = sbr.rel (0) target = $region41
    $region40: #{tpu_custom_call.1} parent=1 // pred_region
      %78 = dma.done [#allocation6], 3072
    $region41: #{tpu_custom_call.1} parent=1 // pred_fallthru
      _
    // Predicated region
    $region42: #{tpu_custom_call.1} parent=1 // pred_check
      _
    $region43: #{tpu_custom_call.1} parent=1 // pred_check_branch
      %80 = sbr.rel (0) target = $region45
    $region44: #{tpu_custom_call.1} parent=1 // pred_region
      %81 = dma.done [#allocation9], 1024
    $region45: #{tpu_custom_call.1} parent=1 // pred_fallthru
      _
    %v82 = vld [vmem:[#allocation2] sm:$0xff]
    %v83 = vld [vmem:[#allocation8] sm:$0xff]
    %v84 = vld [vmem:[#allocation8 + $0x8] sm:$0xff]
    %v85 = vld [vmem:[#allocation8 + $0x10] sm:$0xff]
    %v86 = vld [vmem:[#allocation8 + $0x18] sm:$0xff]
    %v87 = vld [vmem:[#allocation8 + $0x20] sm:$0xff]
    %v88 = vld [vmem:[#allocation8 + $0x28] sm:$0xff]
    %v89 = vld [vmem:[#allocation8 + $0x30] sm:$0xff]
    %v90 = vld [vmem:[#allocation8 + $0x38] sm:$0xff]
    %v91 = vld [vmem:[%s5] sm:$0x1]
    %v93 = vlaneseq
    %v94 = vshrl.u32 %v93, 7
    %v95 = vsub.s32 0, %v94
    %v96 = vrot.slane %v91, %v95
    %vm98 = vcmask 523264
    %v100 = vsel %vm98, %v82, 0
    %102 = vmatprep.subr.mxu0 0.0
    %103 = vmatpush1.msra.mxu0 0.0
    %104 = vmatprep.subr.mxu0 0.0
    %105 = vmatpush1.msra.mxu0 0.0
    %106 = vmatprep.subr.mxu0 0.0
    %107 = vmatpush1.msra.mxu0 0.0
    %108 = vmatprep.subr.mxu0 0.0
    %109 = vmatpush1.msra.mxu0 0.0
    %110 = vmatprep.subr.mxu0 0.0
    %111 = vmatpush1.msra.mxu0 0.0
    %112 = vmatprep.subr.mxu0 0.0
    %113 = vmatpush1.msra.mxu0 0.0
    %114 = vmatprep.subr.mxu0 0.0
    %115 = vmatpush1.msra.mxu0 0.0
    %116 = vmatprep.subr.mxu0 0.0
    %117 = vmatpush1.msra.mxu0 0.0
    %118 = vmatprep.subr.mxu0 0.0
    %119 = vmatpush1.msra.mxu0 %v90
    %120 = vmatprep.subr.mxu0 0.0
    %121 = vmatpush1.msra.mxu0 %v89
    %122 = vmatprep.subr.mxu0 0.0
    %123 = vmatpush1.msra.mxu0 %v88
    %124 = vmatprep.subr.mxu0 0.0
    %125 = vmatpush1.msra.mxu0 %v87
    %126 = vmatprep.subr.mxu0 0.0
    %127 = vmatpush1.msra.mxu0 %v86
    %128 = vmatprep.subr.mxu0 0.0
    %129 = vmatpush1.msra.mxu0 %v85
    %130 = vmatprep.subr.mxu0 0.0
    %131 = vmatpush1.msra.mxu0 %v84
    %132 = vmatprep.subr.mxu0 0.0
    %133 = vmatpush1.msra.mxu0 %v83
    %134 = vmatprep.subr.mxu0 0.0
    %135 = vmatpush2.msra.mxu0 0.0
    %136 = vmatprep.subr.mxu0 0.0
    %137 = vmatpush2.msra.mxu0 0.0
    %138 = vmatprep.subr.mxu0 0.0
    %139 = vmatpush2.msra.mxu0 0.0
    %140 = vmatprep.subr.mxu0 0.0
    %141 = vmatpush2.msra.mxu0 0.0
    %142 = vmatprep.subr.mxu0 0.0
    %143 = vmatpush2.msra.mxu0 0.0
    %144 = vmatprep.subr.mxu0 0.0
    %145 = vmatpush2.msra.mxu0 0.0
    %146 = vmatprep.subr.mxu0 0.0
    %147 = vmatpush2.msra.mxu0 0.0
    %148 = vmatprep.subr.mxu0 0.0
    %149 = vmatpush2.msra.mxu0 0.0
    %150 = vmatprep.subr.mxu0 0.0
    %151 = vmatpush2.msra.mxu0 0.0
    %152 = vmatprep.subr.mxu0 0.0
    %153 = vmatpush2.msra.mxu0 0.0
    %154 = vmatprep.subr.mxu0 0.0
    %155 = vmatpush2.msra.mxu0 0.0
    %156 = vmatprep.subr.mxu0 0.0
    %157 = vmatpush2.msra.mxu0 0.0
    %158 = vmatprep.subr.mxu0 0.0
    %159 = vmatpush2.msra.mxu0 0.0
    %160 = vmatprep.subr.mxu0 0.0
    %161 = vmatpush2.msra.mxu0 0.0
    %162 = vmatprep.subr.mxu0 0.0
    %163 = vmatpush2.msra.mxu0 0.0
    %164 = vmatprep.subr.mxu0 0.0
    %165 = vmatpush2.msra.mxu0 0.0
    %166 = vmatprep.mubr.f32.mxu0 0.0
    %167 = vmatmul.mubr.f32.gmra.mxu0 %v100
    %v168 = vpop.f32.mrf.mxu0
    %v169 = vadd.f32 %v96, %v168
    %v170 = vpop.f32.mrf.mxu0
    %171 = vdwg.mxu0
    %v172 = vld [vmem:[#allocation5] sm:$0xff]
    %v173 = vld [vmem:[#allocation5 + $0x8] sm:$0xff]
    %v174 = vld [vmem:[#allocation5 + $0x10] sm:$0xf]
    %v175 = vld [vmem:[#allocation5 + $0x18] sm:$0xff]
    %v176 = vld [vmem:[#allocation5 + $0x20] sm:$0xff]
    %v177 = vld [vmem:[#allocation5 + $0x28] sm:$0xf]
    %v178 = vld [vmem:[#allocation5 + $0x30] sm:$0xff]
    %v179 = vld [vmem:[#allocation5 + $0x38] sm:$0xff]
    %v180 = vld [vmem:[#allocation5 + $0x40] sm:$0xf]
    %v181 = vld [vmem:[#allocation5 + $0x48] sm:$0xff]
    %v182 = vld [vmem:[#allocation5 + $0x50] sm:$0xff]
    %v183 = vld [vmem:[#allocation5 + $0x58] sm:$0xf]
    %v184 = vld [vmem:[#allocation5 + $0x60] sm:$0xff]
    %v185 = vld [vmem:[#allocation5 + $0x68] sm:$0xff]
    %v186 = vld [vmem:[#allocation5 + $0x70] sm:$0xf]
    %v187 = vld [vmem:[#allocation5 + $0x78] sm:$0xff]
    %v188 = vld [vmem:[#allocation5 + $0x80] sm:$0xff]
    %v189 = vld [vmem:[#allocation5 + $0x88] sm:$0xf]
    %v190 = vld [vmem:[#allocation5 + $0x90] sm:$0xff]
    %v191 = vld [vmem:[#allocation5 + $0x98] sm:$0xff]
    %v192 = vld [vmem:[#allocation5 + $0xa0] sm:$0xf]
    %v193 = vld [vmem:[#allocation5 + $0xa8] sm:$0xff]
    %v194 = vld [vmem:[#allocation5 + $0xb0] sm:$0xff]
    %v195 = vld [vmem:[#allocation5 + $0xb8] sm:$0xf]
    %v197 = vcombine.high %v169, %v169
    %v199 = vunpack.c.l.s4 1966171168
    %v200 = vunpack.c.0.s8 %v199
    %v201 = vlaneseq
    %v202 = vshrl.u32 %v201, 7
    %v203 = vsub.s32 %v200, %v202
    %v204 = vrot.slane %v169, %v203
    %v206 = vunpack.c.l.s4 1966171168
    %v207 = vunpack.c.0.s8 %v206
    %v208 = vlaneseq
    %v209 = vshrl.u32 %v208, 7
    %v210 = vsub.s32 %v207, %v209
    %v211 = vrot.slane %v197, %v210
    %v212 = vcombine.high %v204, %v204
    %v213 = vcombine.high %v211, %v211
    %v215 = vunpack.c.l.s4 1966171168
    %v216 = vunpack.c.0.s8 %v215
    %v217 = vlaneseq
    %v218 = vshrl.u32 %v217, 7
    %v219 = vsub.s32 %v216, %v218
    %v220 = vrot.slane %v204, %v219
    %v222 = vunpack.c.l.s4 1966171168
    %v223 = vunpack.c.0.s8 %v222
    %v224 = vlaneseq
    %v225 = vshrl.u32 %v224, 7
    %v226 = vsub.s32 %v223, %v225
    %v227 = vrot.slane %v211, %v226
    %v229 = vunpack.c.l.s4 1966171168
    %v230 = vunpack.c.0.s8 %v229
    %v231 = vlaneseq
    %v232 = vshrl.u32 %v231, 7
    %v233 = vsub.s32 %v230, %v232
    %v234 = vrot.slane %v212, %v233
    %v236 = vunpack.c.l.s4 1966171168
    %v237 = vunpack.c.0.s8 %v236
    %v238 = vlaneseq
    %v239 = vshrl.u32 %v238, 7
    %v240 = vsub.s32 %v237, %v239
    %v241 = vrot.slane %v213, %v240
    %v242 = vcombine.high %v220, %v220
    %v243 = vcombine.high %v227, %v227
    %v244 = vcombine.high %v234, %v234
    %v245 = vcombine.high %v241, %v241
    %v246 = vlaneseq
    %v247 = vshrl.u32 %v246, 7
    %v248 = vsub.s32 0, %v247
    %v249 = vrot.slane %v220, %v248
    %v250 = vlaneseq
    %v251 = vshrl.u32 %v250, 7
    %v252 = vsub.s32 0, %v251
    %v253 = vrot.slane %v234, %v252
    %v254 = vlaneseq
    %v255 = vshrl.u32 %v254, 7
    %v256 = vsub.s32 0, %v255
    %v257 = vrot.slane %v242, %v256
    %v258 = vlaneseq
    %v259 = vshrl.u32 %v258, 7
    %v260 = vsub.s32 0, %v259
    %v261 = vrot.slane %v244, %v260
    %v262 = vlaneseq
    %v263 = vshrl.u32 %v262, 7
    %v264 = vsub.s32 0, %v263
    %v265 = vrot.slane %v227, %v264
    %v266 = vlaneseq
    %v267 = vshrl.u32 %v266, 7
    %v268 = vsub.s32 0, %v267
    %v269 = vrot.slane %v241, %v268
    %v270 = vlaneseq
    %v271 = vshrl.u32 %v270, 7
    %v272 = vsub.s32 0, %v271
    %v273 = vrot.slane %v243, %v272
    %v274 = vlaneseq
    %v275 = vshrl.u32 %v274, 7
    %v276 = vsub.s32 0, %v275
    %v277 = vrot.slane %v245, %v276
    %v286 = vadd.f32 %v172, %v249
    %v287 = vadd.f32 %v173, %v249
    %v288 = vadd.f32 %v174, %v249
    %v289 = vadd.f32 %v175, %v253
    %v290 = vadd.f32 %v176, %v253
    %v291 = vadd.f32 %v177, %v253
    %v292 = vadd.f32 %v178, %v257
    %v293 = vadd.f32 %v179, %v257
    %v294 = vadd.f32 %v180, %v257
    %v295 = vadd.f32 %v181, %v261
    %v296 = vadd.f32 %v182, %v261
    %v297 = vadd.f32 %v183, %v261
    %v298 = vadd.f32 %v184, %v265
    %v299 = vadd.f32 %v185, %v265
    %v300 = vadd.f32 %v186, %v265
    %v301 = vadd.f32 %v187, %v269
    %v302 = vadd.f32 %v188, %v269
    %v303 = vadd.f32 %v189, %v269
    %v304 = vadd.f32 %v190, %v273
    %v305 = vadd.f32 %v191, %v273
    %v306 = vadd.f32 %v192, %v273
    %v307 = vadd.f32 %v193, %v277
    %v308 = vadd.f32 %v194, %v277
    %v309 = vadd.f32 %v195, %v277
    %v310 = vtanh.pop %v286
    %v311 = vtanh.pop %v287
    %v312 = vtanh.pop %v288
    %v313 = vtanh.pop %v289
    %v314 = vtanh.pop %v290
    %v315 = vtanh.pop %v291
    %v316 = vtanh.pop %v292
    %v317 = vtanh.pop %v293
    %v318 = vtanh.pop %v294
    %v319 = vtanh.pop %v295
    %v320 = vtanh.pop %v296
    %v321 = vtanh.pop %v297
    %v322 = vtanh.pop %v298
    %v323 = vtanh.pop %v299
    %v324 = vtanh.pop %v300
    %v325 = vtanh.pop %v301
    %v326 = vtanh.pop %v302
    %v327 = vtanh.pop %v303
    %v328 = vtanh.pop %v304
    %v329 = vtanh.pop %v305
    %v330 = vtanh.pop %v306
    %v331 = vtanh.pop %v307
    %v332 = vtanh.pop %v308
    %v333 = vtanh.pop %v309
    %v334 = vld [vmem:[%s6] sm:$0x1]
    %v336 = vlaneseq
    %v337 = vshrl.u32 %v336, 7
    %v338 = vsub.s32 0, %v337
    %v339 = vrot.slane %v334, %v338
    %v341 = vmul.f32 %v310, %v339
    %v342 = vmul.f32 %v311, %v339
    %v343 = vmul.f32 %v312, %v339
    %v344 = vmul.f32 %v313, %v339
    %v345 = vmul.f32 %v314, %v339
    %v346 = vmul.f32 %v315, %v339
    %v347 = vmul.f32 %v316, %v339
    %v348 = vmul.f32 %v317, %v339
    %v349 = vmul.f32 %v318, %v339
    %v350 = vmul.f32 %v319, %v339
    %v351 = vmul.f32 %v320, %v339
    %v352 = vmul.f32 %v321, %v339
    %v353 = vmul.f32 %v322, %v339
    %v354 = vmul.f32 %v323, %v339
    %v355 = vmul.f32 %v324, %v339
    %v356 = vmul.f32 %v325, %v339
    %v357 = vmul.f32 %v326, %v339
    %v358 = vmul.f32 %v327, %v339
    %v359 = vmul.f32 %v328, %v339
    %v360 = vmul.f32 %v329, %v339
    %v361 = vmul.f32 %v330, %v339
    %v362 = vmul.f32 %v331, %v339
    %v363 = vmul.f32 %v332, %v339
    %v364 = vmul.f32 %v333, %v339
    %v365 = vsel %vm98, %v341, 0.0
    %366 = vadd.xlane.f32.xlu0 %v365
    %v367 = vpop.xlane.xlu0 %366
    %v368 = vsel %vm98, %v342, 0.0
    %369 = vadd.xlane.f32.xlu0 %v368
    %v370 = vpop.xlane.xlu0 %369
    %vm371 = vcmask 519168
    %v372 = vsel %vm371, %v343, 0.0
    %373 = vadd.xlane.f32.xlu0 %v372
    %v374 = vpop.xlane.xlu0 %373
    %v375 = vsel %vm98, %v344, 0.0
    %376 = vadd.xlane.f32.xlu0 %v375
    %v377 = vpop.xlane.xlu0 %376
    %v378 = vsel %vm98, %v345, 0.0
    %379 = vadd.xlane.f32.xlu0 %v378
    %v380 = vpop.xlane.xlu0 %379
    %v381 = vsel %vm371, %v346, 0.0
    %382 = vadd.xlane.f32.xlu0 %v381
    %v383 = vpop.xlane.xlu0 %382
    %v384 = vsel %vm98, %v347, 0.0
    %385 = vadd.xlane.f32.xlu0 %v384
    %v386 = vpop.xlane.xlu0 %385
    %v387 = vsel %vm98, %v348, 0.0
    %388 = vadd.xlane.f32.xlu0 %v387
    %v389 = vpop.xlane.xlu0 %388
    %v390 = vsel %vm371, %v349, 0.0
    %391 = vadd.xlane.f32.xlu0 %v390
    %v392 = vpop.xlane.xlu0 %391
    %v393 = vsel %vm98, %v350, 0.0
    %394 = vadd.xlane.f32.xlu0 %v393
    %v395 = vpop.xlane.xlu0 %394
    %v396 = vsel %vm98, %v351, 0.0
    %397 = vadd.xlane.f32.xlu0 %v396
    %v398 = vpop.xlane.xlu0 %397
    %v399 = vsel %vm371, %v352, 0.0
    %400 = vadd.xlane.f32.xlu0 %v399
    %v401 = vpop.xlane.xlu0 %400
    %v402 = vsel %vm98, %v353, 0.0
    %403 = vadd.xlane.f32.xlu0 %v402
    %v404 = vpop.xlane.xlu0 %403
    %v405 = vsel %vm98, %v354, 0.0
    %406 = vadd.xlane.f32.xlu0 %v405
    %v407 = vpop.xlane.xlu0 %406
    %v408 = vsel %vm371, %v355, 0.0
    %409 = vadd.xlane.f32.xlu0 %v408
    %v410 = vpop.xlane.xlu0 %409
    %v411 = vsel %vm98, %v356, 0.0
    %412 = vadd.xlane.f32.xlu0 %v411
    %v413 = vpop.xlane.xlu0 %412
    %v414 = vsel %vm98, %v357, 0.0
    %415 = vadd.xlane.f32.xlu0 %v414
    %v416 = vpop.xlane.xlu0 %415
    %v417 = vsel %vm371, %v358, 0.0
    %418 = vadd.xlane.f32.xlu0 %v417
    %v419 = vpop.xlane.xlu0 %418
    %v420 = vsel %vm98, %v359, 0.0
    %421 = vadd.xlane.f32.xlu0 %v420
    %v422 = vpop.xlane.xlu0 %421
    %v423 = vsel %vm98, %v360, 0.0
    %424 = vadd.xlane.f32.xlu0 %v423
    %v425 = vpop.xlane.xlu0 %424
    %v426 = vsel %vm371, %v361, 0.0
    %427 = vadd.xlane.f32.xlu0 %v426
    %v428 = vpop.xlane.xlu0 %427
    %v429 = vsel %vm98, %v362, 0.0
    %430 = vadd.xlane.f32.xlu0 %v429
    %v431 = vpop.xlane.xlu0 %430
    %v432 = vsel %vm98, %v363, 0.0
    %433 = vadd.xlane.f32.xlu0 %v432
    %v434 = vpop.xlane.xlu0 %433
    %v435 = vsel %vm371, %v364, 0.0
    %436 = vadd.xlane.f32.xlu0 %v435
    %v437 = vpop.xlane.xlu0 %436
    %v462 = vlaneseq
    %v463 = vand.u32 %v462, 127
    %v464 = vlaneseq
    %v465 = vshrl.u32 %v464, 7
    %v466 = vsub.s32 %v463, %v465
    %v467 = vrot.slane %v367, %v466
    %v468 = vadd.s32 %v463, 4294967288
    %v469 = vlaneseq
    %v470 = vshrl.u32 %v469, 7
    %v471 = vsub.s32 %v468, %v470
    %v472 = vrot.slane %v370, %v471
    %vm473 = vcmask 130112
    %v474 = vsel %vm473, %v472, %v467
    %v475 = vadd.s32 %v463, 4294967280
    %v476 = vlaneseq
    %v477 = vshrl.u32 %v476, 7
    %v478 = vsub.s32 %v475, %v477
    %v479 = vrot.slane %v374, %v478
    %vm480 = vcmask 195712
    %v481 = vsel %vm480, %v479, %v474
    %v482 = vlaneseq
    %v483 = vshrl.u32 %v482, 7
    %v484 = vsub.s32 %v463, %v483
    %v485 = vrot.slane %v377, %v484
    %v486 = vlaneseq
    %v487 = vshrl.u32 %v486, 7
    %v488 = vsub.s32 %v468, %v487
    %v489 = vrot.slane %v380, %v488
    %v490 = vsel %vm473, %v489, %v485
    %v491 = vlaneseq
    %v492 = vshrl.u32 %v491, 7
    %v493 = vsub.s32 %v475, %v492
    %v494 = vrot.slane %v383, %v493
    %v495 = vsel %vm480, %v494, %v490
    %v496 = vlaneseq
    %v497 = vshrl.u32 %v496, 7
    %v498 = vsub.s32 %v463, %v497
    %v499 = vrot.slane %v386, %v498
    %v500 = vlaneseq
    %v501 = vshrl.u32 %v500, 7
    %v502 = vsub.s32 %v468, %v501
    %v503 = vrot.slane %v389, %v502
    %v504 = vsel %vm473, %v503, %v499
    %v505 = vlaneseq
    %v506 = vshrl.u32 %v505, 7
    %v507 = vsub.s32 %v475, %v506
    %v508 = vrot.slane %v392, %v507
    %v509 = vsel %vm480, %v508, %v504
    %v510 = vlaneseq
    %v511 = vshrl.u32 %v510, 7
    %v512 = vsub.s32 %v463, %v511
    %v513 = vrot.slane %v395, %v512
    %v514 = vlaneseq
    %v515 = vshrl.u32 %v514, 7
    %v516 = vsub.s32 %v468, %v515
    %v517 = vrot.slane %v398, %v516
    %v518 = vsel %vm473, %v517, %v513
    %v519 = vlaneseq
    %v520 = vshrl.u32 %v519, 7
    %v521 = vsub.s32 %v475, %v520
    %v522 = vrot.slane %v401, %v521
    %v523 = vsel %vm480, %v522, %v518
    %v524 = vlaneseq
    %v525 = vshrl.u32 %v524, 7
    %v526 = vsub.s32 %v463, %v525
    %v527 = vrot.slane %v404, %v526
    %v528 = vlaneseq
    %v529 = vshrl.u32 %v528, 7
    %v530 = vsub.s32 %v468, %v529
    %v531 = vrot.slane %v407, %v530
    %v532 = vsel %vm473, %v531, %v527
    %v533 = vlaneseq
    %v534 = vshrl.u32 %v533, 7
    %v535 = vsub.s32 %v475, %v534
    %v536 = vrot.slane %v410, %v535
    %v537 = vsel %vm480, %v536, %v532
    %v538 = vlaneseq
    %v539 = vshrl.u32 %v538, 7
    %v540 = vsub.s32 %v463, %v539
    %v541 = vrot.slane %v413, %v540
    %v542 = vlaneseq
    %v543 = vshrl.u32 %v542, 7
    %v544 = vsub.s32 %v468, %v543
    %v545 = vrot.slane %v416, %v544
    %v546 = vsel %vm473, %v545, %v541
    %v547 = vlaneseq
    %v548 = vshrl.u32 %v547, 7
    %v549 = vsub.s32 %v475, %v548
    %v550 = vrot.slane %v419, %v549
    %v551 = vsel %vm480, %v550, %v546
    %v552 = vlaneseq
    %v553 = vshrl.u32 %v552, 7
    %v554 = vsub.s32 %v463, %v553
    %v555 = vrot.slane %v422, %v554
    %v556 = vlaneseq
    %v557 = vshrl.u32 %v556, 7
    %v558 = vsub.s32 %v468, %v557
    %v559 = vrot.slane %v425, %v558
    %v560 = vsel %vm473, %v559, %v555
    %v561 = vlaneseq
    %v562 = vshrl.u32 %v561, 7
    %v563 = vsub.s32 %v475, %v562
    %v564 = vrot.slane %v428, %v563
    %v565 = vsel %vm480, %v564, %v560
    %v566 = vlaneseq
    %v567 = vshrl.u32 %v566, 7
    %v568 = vsub.s32 %v463, %v567
    %v569 = vrot.slane %v431, %v568
    %v570 = vlaneseq
    %v571 = vshrl.u32 %v570, 7
    %v572 = vsub.s32 %v468, %v571
    %v573 = vrot.slane %v434, %v572
    %v574 = vsel %vm473, %v573, %v569
    %v575 = vlaneseq
    %v576 = vshrl.u32 %v575, 7
    %v577 = vsub.s32 %v475, %v576
    %v578 = vrot.slane %v437, %v577
    %v579 = vsel %vm480, %v578, %v574
    %vm580 = vcmask 1041409
    %v581 = vsel %vm580, %v495, %v481
    %vm582 = vcmask 1042434
    %v583 = vsel %vm582, %v509, %v581
    %vm584 = vcmask 1043459
    %v585 = vsel %vm584, %v523, %v583
    %vm586 = vcmask 1044484
    %v587 = vsel %vm586, %v537, %v585
    %vm588 = vcmask 1045509
    %v589 = vsel %vm588, %v551, %v587
    %vm590 = vcmask 1046534
    %v591 = vsel %vm590, %v565, %v589
    %vm592 = vcmask 1047559
    %v593 = vsel %vm592, %v579, %v591
    %vm595 = vcmask 162816
    %v596 = vsel %vm595, %v593, -inf
    %597 = vmax.xlane.f32.xlu0 %v596
    %v598 = vpop.xlane.xlu0 %597
    %v600 = vlaneseq
    %v601 = vshrl.u32 %v600, 7
    %v602 = vsub.s32 0, %v601
    %v603 = vrot.slane %v598, %v602
    %v604 = vlaneseq
    %v605 = vshrl.u32 %v604, 7
    %v606 = vsub.s32 1, %v605
    %v607 = vrot.slane %v598, %v606
    %v608 = vlaneseq
    %v609 = vshrl.u32 %v608, 7
    %v610 = vsub.s32 2, %v609
    %v611 = vrot.slane %v598, %v610
    %v612 = vlaneseq
    %v613 = vshrl.u32 %v612, 7
    %v614 = vsub.s32 3, %v613
    %v615 = vrot.slane %v598, %v614
    %v616 = vlaneseq
    %v617 = vshrl.u32 %v616, 7
    %v618 = vsub.s32 4, %v617
    %v619 = vrot.slane %v598, %v618
    %v620 = vlaneseq
    %v621 = vshrl.u32 %v620, 7
    %v622 = vsub.s32 5, %v621
    %v623 = vrot.slane %v598, %v622
    %v624 = vlaneseq
    %v625 = vshrl.u32 %v624, 7
    %v626 = vsub.s32 6, %v625
    %v627 = vrot.slane %v598, %v626
    %v628 = vlaneseq
    %v629 = vshrl.u32 %v628, 7
    %v630 = vsub.s32 7, %v629
    %v631 = vrot.slane %v598, %v630
    %v640 = vsub.f32 %v367, %v603
    %v641 = vsub.f32 %v370, %v603
    %v642 = vsub.f32 %v374, %v603
    %v643 = vsub.f32 %v377, %v607
    %v644 = vsub.f32 %v380, %v607
    %v645 = vsub.f32 %v383, %v607
    %v646 = vsub.f32 %v386, %v611
    %v647 = vsub.f32 %v389, %v611
    %v648 = vsub.f32 %v392, %v611
    %v649 = vsub.f32 %v395, %v615
    %v650 = vsub.f32 %v398, %v615
    %v651 = vsub.f32 %v401, %v615
    %v652 = vsub.f32 %v404, %v619
    %v653 = vsub.f32 %v407, %v619
    %v654 = vsub.f32 %v410, %v619
    %v655 = vsub.f32 %v413, %v623
    %v656 = vsub.f32 %v416, %v623
    %v657 = vsub.f32 %v419, %v623
    %v658 = vsub.f32 %v422, %v627
    %v659 = vsub.f32 %v425, %v627
    %v660 = vsub.f32 %v428, %v627
    %v661 = vsub.f32 %v431, %v631
    %v662 = vsub.f32 %v434, %v631
    %v663 = vsub.f32 %v437, %v631
    %v664 = vmul.f32 %v640, 1.442695
    %v665 = vpow.pop %v664
    %v666 = vmul.f32 %v641, 1.442695
    %v667 = vpow.pop %v666
    %v668 = vmul.f32 %v642, 1.442695
    %v669 = vpow.pop %v668
    %v670 = vmul.f32 %v643, 1.442695
    %v671 = vpow.pop %v670
    %v672 = vmul.f32 %v644, 1.442695
    %v673 = vpow.pop %v672
    %v674 = vmul.f32 %v645, 1.442695
    %v675 = vpow.pop %v674
    %v676 = vmul.f32 %v646, 1.442695
    %v677 = vpow.pop %v676
    %v678 = vmul.f32 %v647, 1.442695
    %v679 = vpow.pop %v678
    %v680 = vmul.f32 %v648, 1.442695
    %v681 = vpow.pop %v680
    %v682 = vmul.f32 %v649, 1.442695
    %v683 = vpow.pop %v682
    %v684 = vmul.f32 %v650, 1.442695
    %v685 = vpow.pop %v684
    %v686 = vmul.f32 %v651, 1.442695
    %v687 = vpow.pop %v686
    %v688 = vmul.f32 %v652, 1.442695
    %v689 = vpow.pop %v688
    %v690 = vmul.f32 %v653, 1.442695
    %v691 = vpow.pop %v690
    %v692 = vmul.f32 %v654, 1.442695
    %v693 = vpow.pop %v692
    %v694 = vmul.f32 %v655, 1.442695
    %v695 = vpow.pop %v694
    %v696 = vmul.f32 %v656, 1.442695
    %v697 = vpow.pop %v696
    %v698 = vmul.f32 %v657, 1.442695
    %v699 = vpow.pop %v698
    %v700 = vmul.f32 %v658, 1.442695
    %v701 = vpow.pop %v700
    %v702 = vmul.f32 %v659, 1.442695
    %v703 = vpow.pop %v702
    %v704 = vmul.f32 %v660, 1.442695
    %v705 = vpow.pop %v704
    %v706 = vmul.f32 %v661, 1.442695
    %v707 = vpow.pop %v706
    %v708 = vmul.f32 %v662, 1.442695
    %v709 = vpow.pop %v708
    %v710 = vmul.f32 %v663, 1.442695
    %v711 = vpow.pop %v710
    %v712 = vld [vmem:[%s3] sm:$0xff]
    %v714 = vlaneseq
    %v715 = vshrl.u32 %v714, 7
    %v716 = vsub.s32 0, %v715
    %v717 = vrot.slane %v712, %v716
    %719 = vbcast.lane.b32.xlu0 %v717, 256
    %v720 = vpop.permute.xlu0 %719
    %s722 = sor.u32 256, 8
    %723 = vbcast.lane.b32.xlu0 %v717, %s722
    %v724 = vpop.permute.xlu0 %723
    %s726 = sor.u32 256, 16
    %727 = vbcast.lane.b32.xlu0 %v717, %s726
    %v728 = vpop.permute.xlu0 %727
    %v729 = vlaneseq
    %v730 = vshrl.u32 %v729, 7
    %v731 = vsub.s32 1, %v730
    %v732 = vrot.slane %v712, %v731
    %734 = vbcast.lane.b32.xlu0 %v732, 256
    %v735 = vpop.permute.xlu0 %734
    %s737 = sor.u32 256, 8
    %738 = vbcast.lane.b32.xlu0 %v732, %s737
    %v739 = vpop.permute.xlu0 %738
    %s741 = sor.u32 256, 16
    %742 = vbcast.lane.b32.xlu0 %v732, %s741
    %v743 = vpop.permute.xlu0 %742
    %v744 = vlaneseq
    %v745 = vshrl.u32 %v744, 7
    %v746 = vsub.s32 2, %v745
    %v747 = vrot.slane %v712, %v746
    %749 = vbcast.lane.b32.xlu0 %v747, 256
    %v750 = vpop.permute.xlu0 %749
    %s752 = sor.u32 256, 8
    %753 = vbcast.lane.b32.xlu0 %v747, %s752
    %v754 = vpop.permute.xlu0 %753
    %s756 = sor.u32 256, 16
    %757 = vbcast.lane.b32.xlu0 %v747, %s756
    %v758 = vpop.permute.xlu0 %757
    %v759 = vlaneseq
    %v760 = vshrl.u32 %v759, 7
    %v761 = vsub.s32 3, %v760
    %v762 = vrot.slane %v712, %v761
    %764 = vbcast.lane.b32.xlu0 %v762, 256
    %v765 = vpop.permute.xlu0 %764
    %s767 = sor.u32 256, 8
    %768 = vbcast.lane.b32.xlu0 %v762, %s767
    %v769 = vpop.permute.xlu0 %768
    %s771 = sor.u32 256, 16
    %772 = vbcast.lane.b32.xlu0 %v762, %s771
    %v773 = vpop.permute.xlu0 %772
    %v774 = vlaneseq
    %v775 = vshrl.u32 %v774, 7
    %v776 = vsub.s32 4, %v775
    %v777 = vrot.slane %v712, %v776
    %779 = vbcast.lane.b32.xlu0 %v777, 256
    %v780 = vpop.permute.xlu0 %779
    %s782 = sor.u32 256, 8
    %783 = vbcast.lane.b32.xlu0 %v777, %s782
    %v784 = vpop.permute.xlu0 %783
    %s786 = sor.u32 256, 16
    %787 = vbcast.lane.b32.xlu0 %v777, %s786
    %v788 = vpop.permute.xlu0 %787
    %v789 = vlaneseq
    %v790 = vshrl.u32 %v789, 7
    %v791 = vsub.s32 5, %v790
    %v792 = vrot.slane %v712, %v791
    %794 = vbcast.lane.b32.xlu0 %v792, 256
    %v795 = vpop.permute.xlu0 %794
    %s797 = sor.u32 256, 8
    %798 = vbcast.lane.b32.xlu0 %v792, %s797
    %v799 = vpop.permute.xlu0 %798
    %s801 = sor.u32 256, 16
    %802 = vbcast.lane.b32.xlu0 %v792, %s801
    %v803 = vpop.permute.xlu0 %802
    %v804 = vlaneseq
    %v805 = vshrl.u32 %v804, 7
    %v806 = vsub.s32 6, %v805
    %v807 = vrot.slane %v712, %v806
    %809 = vbcast.lane.b32.xlu0 %v807, 256
    %v810 = vpop.permute.xlu0 %809
    %s812 = sor.u32 256, 8
    %813 = vbcast.lane.b32.xlu0 %v807, %s812
    %v814 = vpop.permute.xlu0 %813
    %s816 = sor.u32 256, 16
    %817 = vbcast.lane.b32.xlu0 %v807, %s816
    %v818 = vpop.permute.xlu0 %817
    %v819 = vlaneseq
    %v820 = vshrl.u32 %v819, 7
    %v821 = vsub.s32 7, %v820
    %v822 = vrot.slane %v712, %v821
    %824 = vbcast.lane.b32.xlu0 %v822, 256
    %v825 = vpop.permute.xlu0 %824
    %s827 = sor.u32 256, 8
    %828 = vbcast.lane.b32.xlu0 %v822, %s827
    %v829 = vpop.permute.xlu0 %828
    %s831 = sor.u32 256, 16
    %832 = vbcast.lane.b32.xlu0 %v822, %s831
    %v833 = vpop.permute.xlu0 %832
    %v858 = vmul.f32 %v665, %v720
    %v859 = vmul.f32 %v667, %v724
    %v860 = vmul.f32 %v669, %v728
    %v861 = vmul.f32 %v671, %v735
    %v862 = vmul.f32 %v673, %v739
    %v863 = vmul.f32 %v675, %v743
    %v864 = vmul.f32 %v677, %v750
    %v865 = vmul.f32 %v679, %v754
    %v866 = vmul.f32 %v681, %v758
    %v867 = vmul.f32 %v683, %v765
    %v868 = vmul.f32 %v685, %v769
    %v869 = vmul.f32 %v687, %v773
    %v870 = vmul.f32 %v689, %v780
    %v871 = vmul.f32 %v691, %v784
    %v872 = vmul.f32 %v693, %v788
    %v873 = vmul.f32 %v695, %v795
    %v874 = vmul.f32 %v697, %v799
    %v875 = vmul.f32 %v699, %v803
    %v876 = vmul.f32 %v701, %v810
    %v877 = vmul.f32 %v703, %v814
    %v878 = vmul.f32 %v705, %v818
    %v879 = vmul.f32 %v707, %v825
    %v880 = vmul.f32 %v709, %v829
    %v881 = vmul.f32 %v711, %v833
    %906 = vset.pattern.permute.xlu0 0
    %907 = vperm.xlu0 %906, %v858
    %v908 = vpop.permute.xlu0 %907
    %909 = vset.pattern.permute.xlu0 0
    %910 = vperm.xlu0 %909, %v859
    %v911 = vpop.permute.xlu0 %910
    %912 = vset.pattern.permute.xlu0 0
    %913 = vperm.xlu0 %912, %v860
    %v914 = vpop.permute.xlu0 %913
    %915 = vset.pattern.permute.xlu0 0
    %916 = vperm.xlu0 %915, %v861
    %v917 = vpop.permute.xlu0 %916
    %918 = vset.pattern.permute.xlu0 0
    %919 = vperm.xlu0 %918, %v862
    %v920 = vpop.permute.xlu0 %919
    %921 = vset.pattern.permute.xlu0 0
    %922 = vperm.xlu0 %921, %v863
    %v923 = vpop.permute.xlu0 %922
    %924 = vset.pattern.permute.xlu0 0
    %925 = vperm.xlu0 %924, %v864
    %v926 = vpop.permute.xlu0 %925
    %927 = vset.pattern.permute.xlu0 0
    %928 = vperm.xlu0 %927, %v865
    %v929 = vpop.permute.xlu0 %928
    %930 = vset.pattern.permute.xlu0 0
    %931 = vperm.xlu0 %930, %v866
    %v932 = vpop.permute.xlu0 %931
    %933 = vset.pattern.permute.xlu0 0
    %934 = vperm.xlu0 %933, %v867
    %v935 = vpop.permute.xlu0 %934
    %936 = vset.pattern.permute.xlu0 0
    %937 = vperm.xlu0 %936, %v868
    %v938 = vpop.permute.xlu0 %937
    %939 = vset.pattern.permute.xlu0 0
    %940 = vperm.xlu0 %939, %v869
    %v941 = vpop.permute.xlu0 %940
    %942 = vset.pattern.permute.xlu0 0
    %943 = vperm.xlu0 %942, %v870
    %v944 = vpop.permute.xlu0 %943
    %945 = vset.pattern.permute.xlu0 0
    %946 = vperm.xlu0 %945, %v871
    %v947 = vpop.permute.xlu0 %946
    %948 = vset.pattern.permute.xlu0 0
    %949 = vperm.xlu0 %948, %v872
    %v950 = vpop.permute.xlu0 %949
    %951 = vset.pattern.permute.xlu0 0
    %952 = vperm.xlu0 %951, %v873
    %v953 = vpop.permute.xlu0 %952
    %954 = vset.pattern.permute.xlu0 0
    %955 = vperm.xlu0 %954, %v874
    %v956 = vpop.permute.xlu0 %955
    %957 = vset.pattern.permute.xlu0 0
    %958 = vperm.xlu0 %957, %v875
    %v959 = vpop.permute.xlu0 %958
    %960 = vset.pattern.permute.xlu0 0
    %961 = vperm.xlu0 %960, %v876
    %v962 = vpop.permute.xlu0 %961
    %963 = vset.pattern.permute.xlu0 0
    %964 = vperm.xlu0 %963, %v877
    %v965 = vpop.permute.xlu0 %964
    %966 = vset.pattern.permute.xlu0 0
    %967 = vperm.xlu0 %966, %v878
    %v968 = vpop.permute.xlu0 %967
    %969 = vset.pattern.permute.xlu0 0
    %970 = vperm.xlu0 %969, %v879
    %v971 = vpop.permute.xlu0 %970
    %972 = vset.pattern.permute.xlu0 0
    %973 = vperm.xlu0 %972, %v880
    %v974 = vpop.permute.xlu0 %973
    %975 = vset.pattern.permute.xlu0 0
    %976 = vperm.xlu0 %975, %v881
    %v977 = vpop.permute.xlu0 %976
    %v978 = vlaneseq
    %v979 = vshrl.u32 %v978, 7
    %v980 = vsub.s32 %v463, %v979
    %v981 = vrot.slane %v908, %v980
    %v982 = vlaneseq
    %v983 = vshrl.u32 %v982, 7
    %v984 = vsub.s32 %v468, %v983
    %v985 = vrot.slane %v911, %v984
    %v986 = vsel %vm473, %v985, %v981
    %v987 = vlaneseq
    %v988 = vshrl.u32 %v987, 7
    %v989 = vsub.s32 %v475, %v988
    %v990 = vrot.slane %v914, %v989
    %v991 = vsel %vm480, %v990, %v986
    %v992 = vlaneseq
    %v993 = vshrl.u32 %v992, 7
    %v994 = vsub.s32 %v463, %v993
    %v995 = vrot.slane %v917, %v994
    %v996 = vlaneseq
    %v997 = vshrl.u32 %v996, 7
    %v998 = vsub.s32 %v468, %v997
    %v999 = vrot.slane %v920, %v998
    %v1000 = vsel %vm473, %v999, %v995
    %v1001 = vlaneseq
    %v1002 = vshrl.u32 %v1001, 7
    %v1003 = vsub.s32 %v475, %v1002
    %v1004 = vrot.slane %v923, %v1003
    %v1005 = vsel %vm480, %v1004, %v1000
    %v1006 = vlaneseq
    %v1007 = vshrl.u32 %v1006, 7
    %v1008 = vsub.s32 %v463, %v1007
    %v1009 = vrot.slane %v926, %v1008
    %v1010 = vlaneseq
    %v1011 = vshrl.u32 %v1010, 7
    %v1012 = vsub.s32 %v468, %v1011
    %v1013 = vrot.slane %v929, %v1012
    %v1014 = vsel %vm473, %v1013, %v1009
    %v1015 = vlaneseq
    %v1016 = vshrl.u32 %v1015, 7
    %v1017 = vsub.s32 %v475, %v1016
    %v1018 = vrot.slane %v932, %v1017
    %v1019 = vsel %vm480, %v1018, %v1014
    %v1020 = vlaneseq
    %v1021 = vshrl.u32 %v1020, 7
    %v1022 = vsub.s32 %v463, %v1021
    %v1023 = vrot.slane %v935, %v1022
    %v1024 = vlaneseq
    %v1025 = vshrl.u32 %v1024, 7
    %v1026 = vsub.s32 %v468, %v1025
    %v1027 = vrot.slane %v938, %v1026
    %v1028 = vsel %vm473, %v1027, %v1023
    %v1029 = vlaneseq
    %v1030 = vshrl.u32 %v1029, 7
    %v1031 = vsub.s32 %v475, %v1030
    %v1032 = vrot.slane %v941, %v1031
    %v1033 = vsel %vm480, %v1032, %v1028
    %v1034 = vlaneseq
    %v1035 = vshrl.u32 %v1034, 7
    %v1036 = vsub.s32 %v463, %v1035
    %v1037 = vrot.slane %v944, %v1036
    %v1038 = vlaneseq
    %v1039 = vshrl.u32 %v1038, 7
    %v1040 = vsub.s32 %v468, %v1039
    %v1041 = vrot.slane %v947, %v1040
    %v1042 = vsel %vm473, %v1041, %v1037
    %v1043 = vlaneseq
    %v1044 = vshrl.u32 %v1043, 7
    %v1045 = vsub.s32 %v475, %v1044
    %v1046 = vrot.slane %v950, %v1045
    %v1047 = vsel %vm480, %v1046, %v1042
    %v1048 = vlaneseq
    %v1049 = vshrl.u32 %v1048, 7
    %v1050 = vsub.s32 %v463, %v1049
    %v1051 = vrot.slane %v953, %v1050
    %v1052 = vlaneseq
    %v1053 = vshrl.u32 %v1052, 7
    %v1054 = vsub.s32 %v468, %v1053
    %v1055 = vrot.slane %v956, %v1054
    %v1056 = vsel %vm473, %v1055, %v1051
    %v1057 = vlaneseq
    %v1058 = vshrl.u32 %v1057, 7
    %v1059 = vsub.s32 %v475, %v1058
    %v1060 = vrot.slane %v959, %v1059
    %v1061 = vsel %vm480, %v1060, %v1056
    %v1062 = vlaneseq
    %v1063 = vshrl.u32 %v1062, 7
    %v1064 = vsub.s32 %v463, %v1063
    %v1065 = vrot.slane %v962, %v1064
    %v1066 = vlaneseq
    %v1067 = vshrl.u32 %v1066, 7
    %v1068 = vsub.s32 %v468, %v1067
    %v1069 = vrot.slane %v965, %v1068
    %v1070 = vsel %vm473, %v1069, %v1065
    %v1071 = vlaneseq
    %v1072 = vshrl.u32 %v1071, 7
    %v1073 = vsub.s32 %v475, %v1072
    %v1074 = vrot.slane %v968, %v1073
    %v1075 = vsel %vm480, %v1074, %v1070
    %v1076 = vlaneseq
    %v1077 = vshrl.u32 %v1076, 7
    %v1078 = vsub.s32 %v463, %v1077
    %v1079 = vrot.slane %v971, %v1078
    %v1080 = vlaneseq
    %v1081 = vshrl.u32 %v1080, 7
    %v1082 = vsub.s32 %v468, %v1081
    %v1083 = vrot.slane %v974, %v1082
    %v1084 = vsel %vm473, %v1083, %v1079
    %v1085 = vlaneseq
    %v1086 = vshrl.u32 %v1085, 7
    %v1087 = vsub.s32 %v475, %v1086
    %v1088 = vrot.slane %v977, %v1087
    %v1089 = vsel %vm480, %v1088, %v1084
    %v1090 = vsel %vm580, %v1005, %v991
    %v1091 = vsel %vm582, %v1019, %v1090
    %v1092 = vsel %vm584, %v1033, %v1091
    %v1093 = vsel %vm586, %v1047, %v1092
    %v1094 = vsel %vm588, %v1061, %v1093
    %v1095 = vsel %vm590, %v1075, %v1094
    %v1096 = vsel %vm592, %v1089, %v1095
    %v1098 = vsel %vm595, %v1096, 0.0
    %1099 = vadd.xlane.f32.xlu0 %v1098
    %v1100 = vpop.xlane.xlu0 %1099
    %v1102 = vlaneseq
    %v1103 = vshrl.u32 %v1102, 7
    %v1104 = vsub.s32 0, %v1103
    %v1105 = vrot.slane %v1100, %v1104
    %v1106 = vlaneseq
    %v1107 = vshrl.u32 %v1106, 7
    %v1108 = vsub.s32 1, %v1107
    %v1109 = vrot.slane %v1100, %v1108
    %v1110 = vlaneseq
    %v1111 = vshrl.u32 %v1110, 7
    %v1112 = vsub.s32 2, %v1111
    %v1113 = vrot.slane %v1100, %v1112
    %v1114 = vlaneseq
    %v1115 = vshrl.u32 %v1114, 7
    %v1116 = vsub.s32 3, %v1115
    %v1117 = vrot.slane %v1100, %v1116
    %v1118 = vlaneseq
    %v1119 = vshrl.u32 %v1118, 7
    %v1120 = vsub.s32 4, %v1119
    %v1121 = vrot.slane %v1100, %v1120
    %v1122 = vlaneseq
    %v1123 = vshrl.u32 %v1122, 7
    %v1124 = vsub.s32 5, %v1123
    %v1125 = vrot.slane %v1100, %v1124
    %v1126 = vlaneseq
    %v1127 = vshrl.u32 %v1126, 7
    %v1128 = vsub.s32 6, %v1127
    %v1129 = vrot.slane %v1100, %v1128
    %v1130 = vlaneseq
    %v1131 = vshrl.u32 %v1130, 7
    %v1132 = vsub.s32 7, %v1131
    %v1133 = vrot.slane %v1100, %v1132
    %v1142 = vrcp.pop %v1105
    %v1143 = vmul.f32 %v858, %v1142
    %v1144 = vmul.f32 %v859, %v1142
    %v1145 = vmul.f32 %v860, %v1142
    %v1146 = vrcp.pop %v1109
    %v1147 = vmul.f32 %v861, %v1146
    %v1148 = vmul.f32 %v862, %v1146
    %v1149 = vmul.f32 %v863, %v1146
    %v1150 = vrcp.pop %v1113
    %v1151 = vmul.f32 %v864, %v1150
    %v1152 = vmul.f32 %v865, %v1150
    %v1153 = vmul.f32 %v866, %v1150
    %v1154 = vrcp.pop %v1117
    %v1155 = vmul.f32 %v867, %v1154
    %v1156 = vmul.f32 %v868, %v1154
    %v1157 = vmul.f32 %v869, %v1154
    %v1158 = vrcp.pop %v1121
    %v1159 = vmul.f32 %v870, %v1158
    %v1160 = vmul.f32 %v871, %v1158
    %v1161 = vmul.f32 %v872, %v1158
    %v1162 = vrcp.pop %v1125
    %v1163 = vmul.f32 %v873, %v1162
    %v1164 = vmul.f32 %v874, %v1162
    %v1165 = vmul.f32 %v875, %v1162
    %v1166 = vrcp.pop %v1129
    %v1167 = vmul.f32 %v876, %v1166
    %v1168 = vmul.f32 %v877, %v1166
    %v1169 = vmul.f32 %v878, %v1166
    %v1170 = vrcp.pop %v1133
    %v1171 = vmul.f32 %v879, %v1170
    %v1172 = vmul.f32 %v880, %v1170
    %v1173 = vmul.f32 %v881, %v1170
    %v1174 = vld [vmem:[#allocation7] sm:$0xff]
    %v1175 = vld [vmem:[#allocation7 + $0x8] sm:$0xff]
    %v1176 = vld [vmem:[#allocation7 + $0x10] sm:$0xf]
    %v1177 = vld [vmem:[#allocation7 + $0x18] sm:$0xff]
    %v1178 = vld [vmem:[#allocation7 + $0x20] sm:$0xff]
    %v1179 = vld [vmem:[#allocation7 + $0x28] sm:$0xf]
    %v1180 = vld [vmem:[#allocation7 + $0x30] sm:$0xff]
    %v1181 = vld [vmem:[#allocation7 + $0x38] sm:$0xff]
    %v1182 = vld [vmem:[#allocation7 + $0x40] sm:$0xf]
    %v1183 = vld [vmem:[#allocation7 + $0x48] sm:$0xff]
    %v1184 = vld [vmem:[#allocation7 + $0x50] sm:$0xff]
    %v1185 = vld [vmem:[#allocation7 + $0x58] sm:$0xf]
    %v1186 = vld [vmem:[#allocation7 + $0x60] sm:$0xff]
    %v1187 = vld [vmem:[#allocation7 + $0x68] sm:$0xff]
    %v1188 = vld [vmem:[#allocation7 + $0x70] sm:$0xf]
    %v1189 = vld [vmem:[#allocation7 + $0x78] sm:$0xff]
    %v1190 = vld [vmem:[#allocation7 + $0x80] sm:$0xff]
    %v1191 = vld [vmem:[#allocation7 + $0x88] sm:$0xf]
    %v1192 = vld [vmem:[#allocation7 + $0x90] sm:$0xff]
    %v1193 = vld [vmem:[#allocation7 + $0x98] sm:$0xff]
    %v1194 = vld [vmem:[#allocation7 + $0xa0] sm:$0xf]
    %v1195 = vld [vmem:[#allocation7 + $0xa8] sm:$0xff]
    %v1196 = vld [vmem:[#allocation7 + $0xb0] sm:$0xff]
    %v1197 = vld [vmem:[#allocation7 + $0xb8] sm:$0xf]
    %1199 = vset.pattern.permute.xlu0 0
    %1200 = vperm.xlu0 %1199, %v1143
    %v1201 = vpop.permute.xlu0 %1200
    %1204 = vset.pattern.permute.xlu0 0
    %1205 = vperm.xlu0 %1204, %v1144
    %v1206 = vpop.permute.xlu0 %1205
    %1209 = vset.pattern.permute.xlu0 0
    %1210 = vperm.xlu0 %1209, %v1145
    %v1211 = vpop.permute.xlu0 %1210
    %1214 = vset.pattern.permute.xlu0 0
    %1215 = vperm.xlu0 %1214, %v1147
    %v1216 = vpop.permute.xlu0 %1215
    %1219 = vset.pattern.permute.xlu0 0
    %1220 = vperm.xlu0 %1219, %v1148
    %v1221 = vpop.permute.xlu0 %1220
    %1224 = vset.pattern.permute.xlu0 0
    %1225 = vperm.xlu0 %1224, %v1149
    %v1226 = vpop.permute.xlu0 %1225
    %1229 = vset.pattern.permute.xlu0 0
    %1230 = vperm.xlu0 %1229, %v1151
    %v1231 = vpop.permute.xlu0 %1230
    %1234 = vset.pattern.permute.xlu0 0
    %1235 = vperm.xlu0 %1234, %v1152
    %v1236 = vpop.permute.xlu0 %1235
    %1239 = vset.pattern.permute.xlu0 0
    %1240 = vperm.xlu0 %1239, %v1153
    %v1241 = vpop.permute.xlu0 %1240
    %1244 = vset.pattern.permute.xlu0 0
    %1245 = vperm.xlu0 %1244, %v1155
    %v1246 = vpop.permute.xlu0 %1245
    %1249 = vset.pattern.permute.xlu0 0
    %1250 = vperm.xlu0 %1249, %v1156
    %v1251 = vpop.permute.xlu0 %1250
    %1254 = vset.pattern.permute.xlu0 0
    %1255 = vperm.xlu0 %1254, %v1157
    %v1256 = vpop.permute.xlu0 %1255
    %1259 = vset.pattern.permute.xlu0 0
    %1260 = vperm.xlu0 %1259, %v1159
    %v1261 = vpop.permute.xlu0 %1260
    %1264 = vset.pattern.permute.xlu0 0
    %1265 = vperm.xlu0 %1264, %v1160
    %v1266 = vpop.permute.xlu0 %1265
    %1269 = vset.pattern.permute.xlu0 0
    %1270 = vperm.xlu0 %1269, %v1161
    %v1271 = vpop.permute.xlu0 %1270
    %1274 = vset.pattern.permute.xlu0 0
    %1275 = vperm.xlu0 %1274, %v1163
    %v1276 = vpop.permute.xlu0 %1275
    %1279 = vset.pattern.permute.xlu0 0
    %1280 = vperm.xlu0 %1279, %v1164
    %v1281 = vpop.permute.xlu0 %1280
    %1284 = vset.pattern.permute.xlu0 0
    %1285 = vperm.xlu0 %1284, %v1165
    %v1286 = vpop.permute.xlu0 %1285
    %1289 = vset.pattern.permute.xlu0 0
    %1290 = vperm.xlu0 %1289, %v1167
    %v1291 = vpop.permute.xlu0 %1290
    %1294 = vset.pattern.permute.xlu0 0
    %1295 = vperm.xlu0 %1294, %v1168
    %v1296 = vpop.permute.xlu0 %1295
    %1299 = vset.pattern.permute.xlu0 0
    %1300 = vperm.xlu0 %1299, %v1169
    %v1301 = vpop.permute.xlu0 %1300
    %1304 = vset.pattern.permute.xlu0 0
    %1305 = vperm.xlu0 %1304, %v1171
    %v1306 = vpop.permute.xlu0 %1305
    %1309 = vset.pattern.permute.xlu0 0
    %1310 = vperm.xlu0 %1309, %v1172
    %v1311 = vpop.permute.xlu0 %1310
    %1314 = vset.pattern.permute.xlu0 0
    %1315 = vperm.xlu0 %1314, %v1173
    %v1316 = vpop.permute.xlu0 %1315
    %v1318 = vmul.f32 %v1201, %v1174
    %v1319 = vmul.f32 %v1206, %v1175
    %v1320 = vmul.f32 %v1211, %v1176
    %v1321 = vmul.f32 %v1216, %v1177
    %v1322 = vmul.f32 %v1221, %v1178
    %v1323 = vmul.f32 %v1226, %v1179
    %v1324 = vmul.f32 %v1231, %v1180
    %v1325 = vmul.f32 %v1236, %v1181
    %v1326 = vmul.f32 %v1241, %v1182
    %v1327 = vmul.f32 %v1246, %v1183
    %v1328 = vmul.f32 %v1251, %v1184
    %v1329 = vmul.f32 %v1256, %v1185
    %v1330 = vmul.f32 %v1261, %v1186
    %v1331 = vmul.f32 %v1266, %v1187
    %v1332 = vmul.f32 %v1271, %v1188
    %v1333 = vmul.f32 %v1276, %v1189
    %v1334 = vmul.f32 %v1281, %v1190
    %v1335 = vmul.f32 %v1286, %v1191
    %v1336 = vmul.f32 %v1291, %v1192
    %v1337 = vmul.f32 %v1296, %v1193
    %v1338 = vmul.f32 %v1301, %v1194
    %v1339 = vmul.f32 %v1306, %v1195
    %v1340 = vmul.f32 %v1311, %v1196
    %v1341 = vmul.f32 %v1316, %v1197
    %v1342 = vadd.f32 %v1318, %v1319
    %vm1343 = vcmask 1043456
    %v1344 = vsel %vm1343, %v1320, 0.0
    %v1345 = vadd.f32 %v1342, %v1344
    %v1346 = vrot.slane %v1345, 4
    %v1347 = vadd.f32 %v1345, %v1346
    %v1348 = vrot.slane %v1347, 2
    %v1349 = vadd.f32 %v1347, %v1348
    %v1350 = vrot.slane %v1349, 1
    %v1351 = vadd.f32 %v1349, %v1350
    %v1352 = vadd.f32 %v1321, %v1322
    %v1353 = vsel %vm1343, %v1323, 0.0
    %v1354 = vadd.f32 %v1352, %v1353
    %v1355 = vrot.slane %v1354, 4
    %v1356 = vadd.f32 %v1354, %v1355
    %v1357 = vrot.slane %v1356, 2
    %v1358 = vadd.f32 %v1356, %v1357
    %v1359 = vrot.slane %v1358, 1
    %v1360 = vadd.f32 %v1358, %v1359
    %v1361 = vadd.f32 %v1324, %v1325
    %v1362 = vsel %vm1343, %v1326, 0.0
    %v1363 = vadd.f32 %v1361, %v1362
    %v1364 = vrot.slane %v1363, 4
    %v1365 = vadd.f32 %v1363, %v1364
    %v1366 = vrot.slane %v1365, 2
    %v1367 = vadd.f32 %v1365, %v1366
    %v1368 = vrot.slane %v1367, 1
    %v1369 = vadd.f32 %v1367, %v1368
    %v1370 = vadd.f32 %v1327, %v1328
    %v1371 = vsel %vm1343, %v1329, 0.0
    %v1372 = vadd.f32 %v1370, %v1371
    %v1373 = vrot.slane %v1372, 4
    %v1374 = vadd.f32 %v1372, %v1373
    %v1375 = vrot.slane %v1374, 2
    %v1376 = vadd.f32 %v1374, %v1375
    %v1377 = vrot.slane %v1376, 1
    %v1378 = vadd.f32 %v1376, %v1377
    %v1379 = vadd.f32 %v1330, %v1331
    %v1380 = vsel %vm1343, %v1332, 0.0
    %v1381 = vadd.f32 %v1379, %v1380
    %v1382 = vrot.slane %v1381, 4
    %v1383 = vadd.f32 %v1381, %v1382
    %v1384 = vrot.slane %v1383, 2
    %v1385 = vadd.f32 %v1383, %v1384
    %v1386 = vrot.slane %v1385, 1
    %v1387 = vadd.f32 %v1385, %v1386
    %v1388 = vadd.f32 %v1333, %v1334
    %v1389 = vsel %vm1343, %v1335, 0.0
    %v1390 = vadd.f32 %v1388, %v1389
    %v1391 = vrot.slane %v1390, 4
    %v1392 = vadd.f32 %v1390, %v1391
    %v1393 = vrot.slane %v1392, 2
    %v1394 = vadd.f32 %v1392, %v1393
    %v1395 = vrot.slane %v1394, 1
    %v1396 = vadd.f32 %v1394, %v1395
    %v1397 = vadd.f32 %v1336, %v1337
    %v1398 = vsel %vm1343, %v1338, 0.0
    %v1399 = vadd.f32 %v1397, %v1398
    %v1400 = vrot.slane %v1399, 4
    %v1401 = vadd.f32 %v1399, %v1400
    %v1402 = vrot.slane %v1401, 2
    %v1403 = vadd.f32 %v1401, %v1402
    %v1404 = vrot.slane %v1403, 1
    %v1405 = vadd.f32 %v1403, %v1404
    %v1406 = vadd.f32 %v1339, %v1340
    %v1407 = vsel %vm1343, %v1341, 0.0
    %v1408 = vadd.f32 %v1406, %v1407
    %v1409 = vrot.slane %v1408, 4
    %v1410 = vadd.f32 %v1408, %v1409
    %v1411 = vrot.slane %v1410, 2
    %v1412 = vadd.f32 %v1410, %v1411
    %v1413 = vrot.slane %v1412, 1
    %v1414 = vadd.f32 %v1412, %v1413
    %v1423 = vsel %vm580, %v1360, %v1351
    %v1424 = vsel %vm582, %v1369, %v1423
    %v1425 = vsel %vm584, %v1378, %v1424
    %v1426 = vsel %vm586, %v1387, %v1425
    %v1427 = vsel %vm588, %v1396, %v1426
    %v1428 = vsel %vm590, %v1405, %v1427
    %v1429 = vsel %vm592, %v1414, %v1428
    %1431 = vst [vmem:[#allocation10] sm:$0xff] %v1429
    // Predicated region
    $region46: #{tpu_custom_call.1} parent=1 // pred_check
      _
    $region47: #{tpu_custom_call.1} parent=1 // pred_check_branch
      %1433 = sbr.rel (0) target = $region49
    $region48: #{tpu_custom_call.1} parent=1 // pred_region
      %s1435 = ssub.s32 128, 64
      %1436 = vsyncadd [#allocation4], %s1435
      %s1437 = sshll.u32 [#allocation10], 4
      %s1438 = int_to_ptr.vmem [resolvable:$true] %s1437
      %1443 = dma.vmem_to_hbm [thread:$0]  %s1438, 64, %s7, [#allocation4], 64, 64, 4
    $region49: #{tpu_custom_call.1} parent=1 // pred_fallthru
      _
    // Predicated region
    $region50: #{tpu_custom_call.1} parent=1 // pred_check
      _
    $region51: #{tpu_custom_call.1} parent=1 // pred_check_branch
      %1445 = sbr.rel (0) target = $region53
    $region52: #{tpu_custom_call.1} parent=1 // pred_region
      %1446 = dma.done [#allocation4], 128
    $region53: #{tpu_custom_call.1} parent=1 // pred_fallthru
      _
    %1447 = vsyncpa [#allocation3], 1
    %1448 = vsyncpa [#allocation6], 1
    %1449 = vsyncpa [#allocation9], 1
    %1450 = vsyncpa [#allocation4], 1

</llo_original>
